<compile_context>
chip_gen: v6e
topology: v6e:2x2x1
jax: 0.10.0
libtpu: 0.0.40
codegen_flags: <defaults>
</compile_context>

<pallas_src>
import jax
import jax.numpy as jnp
from jax.experimental import pallas as pl
from jax.experimental.pallas import tpu as pltpu


def _make_sum_kernel(n, weighted):
    """Kernel: o = x0 (+ xi * w[i-1] if weighted else + xi), one write per tile."""

    def kernel(w_ref, *refs):
        x_refs = refs[:n]
        o_ref = refs[n]
        acc = x_refs[0][...].astype(jnp.float32)
        for i in range(1, n):  # n is small and static -> fully unrolled
            xi = x_refs[i][...].astype(jnp.float32)
            if weighted:
                xi = xi * w_ref[i - 1]
            acc = acc + xi
        o_ref[...] = acc.astype(o_ref.dtype)

    return kernel


def pallas_sum_2d(x2d_list, w_eff, weighted, out_dtype, tile_rows):
    """x2d_list: n arrays of shape (R, L); w_eff: (max(n-1,1),) f32 (SMEM prefetch)."""
    n = len(x2d_list)
    R, L = x2d_list[0].shape
    tr = min(tile_rows, R)          # tr is a multiple of 8, or the full R
    grid_r = pl.cdiv(R, tr)

    kernel = _make_sum_kernel(n, weighted)
    row_spec = lambda r, w: (r, 0)  # scalar-prefetch ref is passed positionally

    return pl.pallas_call(
        kernel,
        out_shape=jax.ShapeDtypeStruct((R, L), out_dtype),
        grid_spec=pltpu.PrefetchScalarGridSpec(
            num_scalar_prefetch=1,
            grid=(grid_r,),
            in_specs=[pl.BlockSpec((tr, L), row_spec) for _ in range(n)],
            out_specs=pl.BlockSpec((tr, L), row_spec),
        ),
        compiler_params=pltpu.CompilerParams(
            dimension_semantics=("parallel",),     # no reduction grid axis left
            vmem_limit_bytes=32 * 1024 * 1024,     # explicit, v7x-safe budget
        ),
    )(w_eff, *x2d_list)


class SumPallas:
    """Pallas port of the PyTorch Sum module (forward pass)."""

    def __init__(self, n, weight=False):
        self.n = n
        self.weight = weight
        if weight:
            # deterministic init, same as PyTorch: -arange(1, n) / 2
            self.w = -jnp.arange(1.0, n, dtype=jnp.float32) / 2.0
        else:
            self.w = None

    def __call__(self, x_list):
        n = self.n
        assert len(x_list) == n
        orig_shape = x_list[0].shape
        total = x_list[0].size

        out_dtype = jnp.result_type(*[x.dtype for x in x_list])
        if self.weight:
            w_eff = (jax.nn.sigmoid(self.w) * 2.0).astype(jnp.float32)
            out_dtype = jnp.result_type(out_dtype, jnp.float32)
        else:
            w_eff = jnp.zeros((max(n - 1, 1),), jnp.float32)  # unused by kernel

        # Lane-dense layout: widest lane dim (multiple of 128) dividing total.
        L = 128
        for cand in (2048, 1024, 512, 256, 128):
            if total % cand == 0:
                L = cand
                break
        pad = (-total) % L              # non-zero only if total % 128 != 0
        R = (total + pad) // L

        # Cap per-input block at ~1 MiB: (n+1) arrays x 2 buffers stays small
        # even on v7x's 64 MiB VMEM.
        itemsize = max(x.dtype.itemsize for x in x_list)
        tile_rows = max(8, ((1 << 20) // (L * itemsize)) // 8 * 8)

        def to_2d(x):
            flat = x.reshape(-1)        # native dtype kept; no f32 upcast in HBM
            if pad:
                flat = jnp.pad(flat, (0, pad))
            return flat.reshape(R, L)

        out_2d = pallas_sum_2d(
            [to_2d(x) for x in x_list], w_eff, self.weight, out_dtype, tile_rows
        )
        out_flat = out_2d.reshape(-1)
        if pad:
            out_flat = out_flat[:total]
        return out_flat.reshape(orig_shape)


if __name__ == "__main__":
    key = jax.random.PRNGKey(0)
    n = 3
    B, C, H, W = 2, 4, 16, 16  # NCHW, like the PyTorch conv convention

    keys = jax.random.split(key, n)
    x_list = [jax.random.normal(k, (B, C, H, W), dtype=jnp.float32) for k in keys]

    # Unweighted sum
    mod_plain = SumPallas(n, weight=False)
    y_plain = jax.block_until_ready(mod_plain(x_list))
    ref_plain = x_list[0] + x_list[1] + x_list[2]
    assert y_plain.shape == ref_plain.shape and y_plain.dtype == ref_plain.dtype
    assert jnp.allclose(y_plain, ref_plain, atol=1e-5, rtol=1e-5)

    # Weighted sum
    mod_w = SumPallas(n, weight=True)
    y_w = jax.block_until_ready(mod_w(x_list))
    w_ref = jax.nn.sigmoid(mod_w.w) * 2.0
    ref_w = x_list[0] + x_list[1] * w_ref[0] + x_list[2] * w_ref[1]
    assert jnp.allclose(y_w, ref_w, atol=1e-5, rtol=1e-5)

    print("KERNEL_OK")
</pallas_src>

<mosaic_0001>
module attributes {stable_mosaic.version = 11 : i64} {
  func.func @kernel(%arg0: i32, %arg1: memref<2xf32, #tpu.memory_space<smem>>, %arg2: memref<1x2048xf32, #tpu.memory_space<vmem>>, %arg3: memref<1x2048xf32, #tpu.memory_space<vmem>>, %arg4: memref<1x2048xf32, #tpu.memory_space<vmem>>, %arg5: memref<1x2048xf32, #tpu.memory_space<vmem>>) attributes {dimension_semantics = [#tpu.dimension_semantics<parallel>], iteration_bounds = array<i64: 1>, scalar_prefetch = 1 : i64, scratch_operands = 0 : i64, tpu.core_type = #tpu.core_type<tc>, window_params = [{transform_indices = @transform_0, window_bounds = array<i64: 1, 2048>}, {transform_indices = @transform_1, window_bounds = array<i64: 1, 2048>}, {transform_indices = @transform_2, window_bounds = array<i64: 1, 2048>}, {transform_indices = @transform_3, window_bounds = array<i64: 1, 2048>}]} {
    %c0 = arith.constant 0 : index
    %c0_0 = arith.constant 0 : index
    %0 = vector.load %arg2[%c0, %c0_0] : memref<1x2048xf32, #tpu.memory_space<vmem>>, vector<1x2048xf32>
    %c0_1 = arith.constant 0 : index
    %c0_2 = arith.constant 0 : index
    %1 = vector.load %arg3[%c0_1, %c0_2] : memref<1x2048xf32, #tpu.memory_space<vmem>>, vector<1x2048xf32>
    %2 = arith.addf %0, %1 : vector<1x2048xf32>
    %c0_3 = arith.constant 0 : index
    %c0_4 = arith.constant 0 : index
    %3 = vector.load %arg4[%c0_3, %c0_4] : memref<1x2048xf32, #tpu.memory_space<vmem>>, vector<1x2048xf32>
    %4 = arith.addf %2, %3 : vector<1x2048xf32>
    %c0_5 = arith.constant 0 : index
    %c0_6 = arith.constant 0 : index
    %5 = vector.load %arg5[%c0_5, %c0_6] : memref<1x2048xf32, #tpu.memory_space<vmem>>, vector<1x2048xf32>
    tpu.vector_store %arg5[%c0_5, %c0_6], %4 {strides = array<i32>} : memref<1x2048xf32, #tpu.memory_space<vmem>>, vector<1x2048xf32>,
    return
  }
  func.func @transform_0(%arg0: i32, %arg1: memref<2xf32, #tpu.memory_space<smem>>) -> (i32, i32) {
    %c0_i32 = arith.constant 0 : i32
    %c0_i32_0 = arith.constant 0 : i32
    return %arg0, %c0_i32 : i32, i32
  }
  func.func @transform_1(%arg0: i32, %arg1: memref<2xf32, #tpu.memory_space<smem>>) -> (i32, i32) {
    %c0_i32 = arith.constant 0 : i32
    %c0_i32_0 = arith.constant 0 : i32
    return %arg0, %c0_i32 : i32, i32
  }
  func.func @transform_2(%arg0: i32, %arg1: memref<2xf32, #tpu.memory_space<smem>>) -> (i32, i32) {
    %c0_i32 = arith.constant 0 : i32
    %c0_i32_0 = arith.constant 0 : i32
    return %arg0, %c0_i32 : i32, i32
  }
  func.func @transform_3(%arg0: i32, %arg1: memref<2xf32, #tpu.memory_space<smem>>) -> (i32, i32) {
    %c0_i32 = arith.constant 0 : i32
    %c0_i32_0 = arith.constant 0 : i32
    return %arg0, %c0_i32 : i32, i32
  }
}

</mosaic_0001>

<llo_original>
// kernel: tpu_custom_call.1
$region0: #{tpu_custom_call.1}
  #allocation0 [shape = 'u32[]', space=smem, size = 0x4, offset = 0x4, fixed_abs, tag = 'smem constant byte address 0x4 - core index']
  #allocation1 [shape = 'u32[144,128]{1,0:T(1,128)}', space=vmem, size = 0x12000, scoped, tag = 'internal scratch']
  #allocation2 [shape = 's32[1]{0}', space=sflag, size = 0x4, scoped, tag = 'scoped memory for tpu_custom_call.1']
  #allocation3 [shape = 'u8[512]{0}', space=smem, size = 0x200, scoped, tag = 'prefetched SMEM operand 0']
  %s0 = inlined_call_operand.hbm [shape: f32[2], index: 0, kind: input, shape index: {}]
  %s1 = inlined_call_operand.hbm [shape: f32[1,2048], index: 1, kind: input, shape index: {}]
  %s2 = inlined_call_operand.hbm [shape: f32[1,2048], index: 2, kind: input, shape index: {}]
  %s3 = inlined_call_operand.hbm [shape: f32[1,2048], index: 3, kind: input, shape index: {}]
  %s4 = inlined_call_operand.hbm [shape: f32[1,2048], index: 4, kind: output, shape index: {}]
  %s5 = sld [smem:[#allocation0]]
  $region34: #{tpu_custom_call.1} parent=0
    _
  %s7 = ssub.s32 1, %s5
  %s8 = scalar_select 0, %s7, %s5
  %10 = dma.hbm_to_smem %s0, 16, [#allocation3], [#allocation2]
  %11 = dma.done [#allocation2], 16
  %12 = sfence
  $region1: #{tpu_custom_call.1} parent=0
    #allocation4 [shape = 'u8[8192]{0}', space=vmem, size = 0x2000, scoped, tag = 'input window, operand 1, single buffered']
    #allocation5 [shape = 's32[1]{0}', space=sflag, size = 0x4, scoped, tag = 'scoped memory for tpu_custom_call.1']
    #allocation6 [shape = 's32[1]{0}', space=sflag, size = 0x4, scoped, tag = 'scoped memory for tpu_custom_call.1']
    #allocation7 [shape = 'u8[8192]{0}', space=vmem, size = 0x2000, scoped, tag = 'input window, operand 2, single buffered']
    #allocation8 [shape = 's32[1]{0}', space=sflag, size = 0x4, scoped, tag = 'scoped memory for tpu_custom_call.1']
    #allocation9 [shape = 'u8[8192]{0}', space=vmem, size = 0x2000, scoped, tag = 'input window, operand 3, single buffered']
    #allocation10 [shape = 'u8[8192]{0}', space=vmem, size = 0x2000, scoped, tag = 'output window, operand 0, single buffered']
    %13 = vsyncpa [#allocation5], 0
    %14 = vsyncpa [#allocation8], 0
    %15 = vsyncpa [#allocation6], 0
    // Predicated region
    $region2: #{tpu_custom_call.1} parent=1 // pred_check
      _
    $region3: #{tpu_custom_call.1} parent=1 // pred_check_branch
      %17 = sbr.rel (0) target = $region5
    $region4: #{tpu_custom_call.1} parent=1 // pred_region
      %s19 = ssub.s32 256, 256
      %20 = vsyncadd [#allocation5], %s19
      %s22 = sshll.u32 [#allocation4], 4
      %s23 = int_to_ptr.vmem [resolvable:$true] %s22
      %25 = dma.hbm_to_vmem [thread:$0]  %s1, 256, %s23, [#allocation5]
    $region5: #{tpu_custom_call.1} parent=1 // pred_fallthru
      _
    // Predicated region
    $region6: #{tpu_custom_call.1} parent=1 // pred_check
      _
    $region7: #{tpu_custom_call.1} parent=1 // pred_check_branch
      %27 = sbr.rel (0) target = $region9
    $region8: #{tpu_custom_call.1} parent=1 // pred_region
      %s29 = ssub.s32 256, 256
      %30 = vsyncadd [#allocation8], %s29
      %s32 = sshll.u32 [#allocation7], 4
      %s33 = int_to_ptr.vmem [resolvable:$true] %s32
      %35 = dma.hbm_to_vmem [thread:$0]  %s2, 256, %s33, [#allocation8]
    $region9: #{tpu_custom_call.1} parent=1 // pred_fallthru
      _
    // Predicated region
    $region10: #{tpu_custom_call.1} parent=1 // pred_check
      _
    $region11: #{tpu_custom_call.1} parent=1 // pred_check_branch
      %37 = sbr.rel (0) target = $region13
    $region12: #{tpu_custom_call.1} parent=1 // pred_region
      %s39 = ssub.s32 256, 256
      %40 = vsyncadd [#allocation8], %s39
      %s42 = sshll.u32 [#allocation9], 4
      %s43 = int_to_ptr.vmem [resolvable:$true] %s42
      %45 = dma.hbm_to_vmem [thread:$0]  %s3, 256, %s43, [#allocation8]
    $region13: #{tpu_custom_call.1} parent=1 // pred_fallthru
      _
    // Predicated region
    $region14: #{tpu_custom_call.1} parent=1 // pred_check
      _
    $region15: #{tpu_custom_call.1} parent=1 // pred_check_branch
      %47 = sbr.rel (0) target = $region17
    $region16: #{tpu_custom_call.1} parent=1 // pred_region
      %48 = dma.done [#allocation5], 256
    $region17: #{tpu_custom_call.1} parent=1 // pred_fallthru
      _
    // Predicated region
    $region18: #{tpu_custom_call.1} parent=1 // pred_check
      _
    $region19: #{tpu_custom_call.1} parent=1 // pred_check_branch
      %50 = sbr.rel (0) target = $region21
    $region20: #{tpu_custom_call.1} parent=1 // pred_region
      %51 = dma.done [#allocation8], 256
    $region21: #{tpu_custom_call.1} parent=1 // pred_fallthru
      _
    // Predicated region
    $region22: #{tpu_custom_call.1} parent=1 // pred_check
      _
    $region23: #{tpu_custom_call.1} parent=1 // pred_check_branch
      %53 = sbr.rel (0) target = $region25
    $region24: #{tpu_custom_call.1} parent=1 // pred_region
      %54 = dma.done [#allocation8], 256
    $region25: #{tpu_custom_call.1} parent=1 // pred_fallthru
      _
    %v55 = vld [vmem:[#allocation4] sm:$0xff]
    %v56 = vld [vmem:[#allocation4 + $0x8] sm:$0xff]
    %v57 = vld [vmem:[#allocation7] sm:$0xff]
    %v58 = vld [vmem:[#allocation7 + $0x8] sm:$0xff]
    %v59 = vadd.f32 %v55, %v57
    %v60 = vadd.f32 %v56, %v58
    %v61 = vld [vmem:[#allocation9] sm:$0xff]
    %v62 = vld [vmem:[#allocation9 + $0x8] sm:$0xff]
    %v63 = vadd.f32 %v59, %v61
    %v64 = vadd.f32 %v60, %v62
    %65 = vst [vmem:[#allocation10] sm:$0xff] %v63
    %66 = vst [vmem:[#allocation10 + $0x8] sm:$0xff] %v64
    // Predicated region
    $region26: #{tpu_custom_call.1} parent=1 // pred_check
      _
    $region27: #{tpu_custom_call.1} parent=1 // pred_check_branch
      %68 = sbr.rel (0) target = $region29
    $region28: #{tpu_custom_call.1} parent=1 // pred_region
      %s70 = ssub.s32 256, 256
      %71 = vsyncadd [#allocation6], %s70
      %s73 = sshll.u32 [#allocation10], 4
      %s74 = int_to_ptr.vmem [resolvable:$true] %s73
      %76 = dma.vmem_to_hbm [thread:$0]  %s74, 256, %s4, [#allocation6]
    $region29: #{tpu_custom_call.1} parent=1 // pred_fallthru
      _
    // Predicated region
    $region30: #{tpu_custom_call.1} parent=1 // pred_check
      _
    $region31: #{tpu_custom_call.1} parent=1 // pred_check_branch
      %78 = sbr.rel (0) target = $region33
    $region32: #{tpu_custom_call.1} parent=1 // pred_region
      %79 = dma.done [#allocation6], 256
    $region33: #{tpu_custom_call.1} parent=1 // pred_fallthru
      _
    %80 = vsyncpa [#allocation5], 1
    %81 = vsyncpa [#allocation8], 1
    %82 = vsyncpa [#allocation6], 1

</llo_original>
